<compile_context>
chip_gen: v7x
topology: tpu7x:2x2x1
jax: 0.10.0
libtpu: 0.0.40
codegen_flags: <defaults>
</compile_context>

<pallas_src>
import functools

import jax
import jax.numpy as jnp
from jax.experimental import pallas as pl
from jax.experimental.pallas import tpu as pltpu


# ---------------------------------------------------------------------------
# Kernel bodies
# ---------------------------------------------------------------------------
def _make_kernel(mode):
    """mode:
       'stride_ref'   : x block is (C_in, 2*TL); even lanes via a strided ref load.
       'stride_value' : x block is (C_in, 2*TL); even lanes selected after a full load.
       'pre'          : x block is (C_in, TL); input was subsampled by the wrapper.
    """

    def kernel(x_ref, w_ref, b_ref, o_ref):
        tl = o_ref.shape[-1]
        if mode == "stride_ref":
            xe = x_ref[:, pl.ds(0, tl, stride=2)]        # even columns of the 2*TL block
        elif mode == "stride_value":
            xe = x_ref[...][:, ::2]                      # lane deinterleave (XLU)
        else:
            xe = x_ref[...]
        h = xe * jax.nn.sigmoid(xe)                      # Swish (VPU + EUP)
        acc = jnp.dot(w_ref[...], h,                     # fused 1x1 convs on the MXU
                      preferred_element_type=jnp.float32)
        o_ref[...] = (acc + b_ref[...]).astype(o_ref.dtype)

    return kernel


# ---------------------------------------------------------------------------
# Tile / VMEM budgeting (per TPU generation)
# ---------------------------------------------------------------------------
def _vmem_capacity_bytes():
    try:
        return int(pltpu.get_tpu_info().vmem_capacity_bytes)
    except Exception:
        return 64 * 1024 * 1024          # conservative default: v7x per-TensorCore VMEM


def _pick_tile(C_in, C_out, L_out, itemsize, lane_tile):
    """Lane tile (multiple of 128 when tiling) + vmem_limit_bytes, budgeted per chip gen."""
    vmem_cap = _vmem_capacity_bytes()
    budget = vmem_cap // 3                               # per-step working-set target
    resident = 2 * C_out * (C_in * itemsize + 4)         # W + b (allow two buffers)
    per_lane = 2 * (2 * C_in + C_out) * itemsize         # dbl-buffered input(2*TL) + out(TL)
    cap = (budget - resident) // max(per_lane, 1)
    cap = max(128, (cap // 128) * 128)                   # lane-dense tiles
    cap = min(cap, max(128, (lane_tile // 128) * 128))
    tl = L_out if L_out <= cap else cap                  # full extent when it fits
    vmem_limit = int(min(vmem_cap * 3 // 4, 96 * 1024 * 1024))
    return tl, vmem_limit


# ---------------------------------------------------------------------------
# pallas_call builder + capability probe
# ---------------------------------------------------------------------------
def _build_call(mode, N, C_in, C_out, L_out, tl, vmem_limit, dtype):
    t_in = tl if mode == "pre" else 2 * tl
    return pl.pallas_call(
        _make_kernel(mode),
        out_shape=jax.ShapeDtypeStruct((N, C_out, L_out), dtype),
        grid=(N, pl.cdiv(L_out, tl)),
        in_specs=[
            # activations: one batch element x one L tile per grid step
            pl.BlockSpec((None, C_in, t_in), lambda n, j: (n, 0, j)),
            # fused weight-normalized 1x1 conv weights + bias: VMEM-resident
            pl.BlockSpec((C_out, C_in), lambda n, j: (0, 0)),
            pl.BlockSpec((C_out, 1), lambda n, j: (0, 0)),
        ],
        out_specs=pl.BlockSpec((None, C_out, tl), lambda n, j: (n, 0, j)),
        compiler_params=pltpu.CompilerParams(
            # both axes independent -> megacore sharding on v7x, no-op on v5e/v6e
            dimension_semantics=("parallel", "parallel"),
            vmem_limit_bytes=vmem_limit,
        ),
    )


@functools.lru_cache(maxsize=None)
def _select_mode(N, C_in, C_out, L, L_out, tl, vmem_limit, dtype_name):
    """Pick the best kernel variant that actually lowers on this Mosaic/TPU.

    The fused variants read full-resolution x and deinterleave the even lanes in-kernel
    (halves input HBM traffic).  Lane-strided reads are not lowerable on every Mosaic
    version, so probe-compile them (AOT, shapes only) and fall back to the pre-subsampled
    layout, which uses only always-supported features.
    """
    dtype = jnp.dtype(dtype_name)
    x_s = jax.ShapeDtypeStruct((N, C_in, L), dtype)
    w_s = jax.ShapeDtypeStruct((C_out, C_in), dtype)
    b_s = jax.ShapeDtypeStruct((C_out, 1), jnp.float32)
    for mode in ("stride_ref", "stride_value"):
        try:
            call = _build_call(mode, N, C_in, C_out, L_out, tl, vmem_limit, dtype)
            jax.jit(call).lower(x_s, w_s, b_s).compile()
            return mode
        except Exception:
            continue
    return "pre"


# ---------------------------------------------------------------------------
# Wrapper
# ---------------------------------------------------------------------------
def _normalize_weight(log_weight_norm, weight):
    """normalize_weight_jit: exp(lwn) * w / (||w||_{dims[1,2]} + 1e-5)."""
    wn = jnp.sqrt(jnp.sum(weight * weight, axis=(1, 2), keepdims=True))
    return jnp.exp(log_weight_norm) * weight / (wn + 1e-5)


def factorized_reduce(x, w1, lwn1, b1, w2, lwn2, b2, *, lane_tile=2048):
    """Pallas forward of FactorizedReduce.

    x   : (N, C_in, L)
    w_i : (C_out_i, C_in, 1) raw conv weights; lwn_i: (C_out_i, 1, 1); b_i: (C_out_i,)
    returns (N, C_out, ceil(L/2)) with channels [conv_1 | conv_2] concatenated.
    """
    N, C_in, L = x.shape
    L_out = (L + 1) // 2                       # conv1d(k=1, stride=2, pad=0) output length

    # Fuse the two weight-normalized 1x1 convs into one matrix + bias (tiny f32 math).
    W = jnp.concatenate(
        [_normalize_weight(lwn1, w1), _normalize_weight(lwn2, w2)], axis=0
    )[:, :, 0].astype(x.dtype)                                         # (C_out, C_in)
    b = jnp.concatenate([b1, b2], axis=0).astype(jnp.float32)[:, None]  # (C_out, 1)
    C_out = W.shape[0]

    itemsize = jnp.dtype(x.dtype).itemsize
    tl, vmem_limit = _pick_tile(C_in, C_out, L_out, itemsize, lane_tile)
    mode = _select_mode(N, C_in, C_out, L, L_out, tl, vmem_limit,
                        jnp.dtype(x.dtype).name)

    call = _build_call(mode, N, C_in, C_out, L_out, tl, vmem_limit, x.dtype)
    if mode == "pre":
        # Fallback layout: materialize the stride-2 positions once in the wrapper
        # (Swish commutes with the subsample, so it stays fused in-kernel).
        return call(x[:, :, ::2], W, b)
    return call(x, W, b)


# ---------------------------------------------------------------------------
# Pure-JAX reference + self-test
# ---------------------------------------------------------------------------
def _reference_factorized_reduce(x, w1, lwn1, b1, w2, lwn2, b2):
    """Pure-JAX reference with the same semantics as the PyTorch module."""
    xs = x * jax.nn.sigmoid(x)
    xe = xs[:, :, ::2]
    wn1 = _normalize_weight(lwn1, w1)[:, :, 0]
    wn2 = _normalize_weight(lwn2, w2)[:, :, 0]
    o1 = jnp.einsum("oc,ncl->nol", wn1, xe,
                    precision=jax.lax.Precision.HIGHEST) + b1[None, :, None]
    o2 = jnp.einsum("oc,ncl->nol", wn2, xe,
                    precision=jax.lax.Precision.HIGHEST) + b2[None, :, None]
    return jnp.concatenate([o1, o2], axis=1)


if __name__ == "__main__":
    key = jax.random.PRNGKey(0)
    N, C_in, C_out, L = 2, 4, 8, 16
    k = jax.random.split(key, 5)

    x = jax.random.normal(k[0], (N, C_in, L), dtype=jnp.float32)
    w1 = 0.1 * jax.random.normal(k[1], (C_out // 2, C_in, 1), dtype=jnp.float32)
    w2 = 0.1 * jax.random.normal(k[2], (C_out - C_out // 2, C_in, 1), dtype=jnp.float32)
    b1 = 0.1 * jax.random.normal(k[3], (C_out // 2,), dtype=jnp.float32)
    b2 = 0.1 * jax.random.normal(k[4], (C_out - C_out // 2,), dtype=jnp.float32)
    # log_weight_norm initialized exactly as Conv1D.__init__: log(||w||_{[1,2]} + 0.01)
    lwn1 = jnp.log(jnp.sqrt(jnp.sum(w1 * w1, axis=(1, 2), keepdims=True)) + 0.01)
    lwn2 = jnp.log(jnp.sqrt(jnp.sum(w2 * w2, axis=(1, 2), keepdims=True)) + 0.01)

    fr = jax.jit(factorized_reduce)
    out = jax.block_until_ready(fr(x, w1, lwn1, b1, w2, lwn2, b2))

    ref = _reference_factorized_reduce(x, w1, lwn1, b1, w2, lwn2, b2)
    assert out.shape == (N, C_out, (L + 1) // 2), out.shape
    # tolerance loose enough for default MXU f32-pass rounding, tight enough to catch
    # any structural error (wrong stride / concat / bias would be O(0.1))
    assert jnp.allclose(out, ref, atol=2e-3, rtol=2e-3), float(
        jnp.max(jnp.abs(out - ref)))

    print("KERNEL_OK")
</pallas_src>

<mosaic_0001>
module attributes {stable_mosaic.version = 11 : i64} {
  func.func @kernel(%arg0: i32, %arg1: i32, %arg2: memref<1x4x8xf32, #tpu.memory_space<vmem>>, %arg3: memref<8x4xf32, #tpu.memory_space<vmem>>, %arg4: memref<8x1xf32, #tpu.memory_space<vmem>>, %arg5: memref<1x8x8xf32, #tpu.memory_space<vmem>>) attributes {dimension_semantics = [#tpu.dimension_semantics<parallel>, #tpu.dimension_semantics<parallel>], iteration_bounds = array<i64: 2, 1>, scalar_prefetch = 0 : i64, scratch_operands = 0 : i64, tpu.core_type = #tpu.core_type<tc>, window_params = [{transform_indices = @transform_0, window_bounds = array<i64: 1, 4, 8>}, {pipeline_mode = #tpu.pipeline_mode<synchronous>, transform_indices = @transform_1, window_bounds = array<i64: 8, 4>}, {pipeline_mode = #tpu.pipeline_mode<synchronous>, transform_indices = @transform_2, window_bounds = array<i64: 8, 1>}, {transform_indices = @transform_3, window_bounds = array<i64: 1, 8, 8>}]} {
    %c0 = arith.constant 0 : index
    %c0_0 = arith.constant 0 : index
    %c0_1 = arith.constant 0 : index
    %0 = vector.load %arg2[%c0, %c0_0, %c0_1] : memref<1x4x8xf32, #tpu.memory_space<vmem>>, vector<1x4x8xf32>
    %1 = vector.shape_cast %0 : vector<1x4x8xf32> to vector<4x8xf32>
    %2 = arith.negf %1 : vector<4x8xf32>
    %3 = math.exp %2 : vector<4x8xf32>
    %cst = arith.constant 1.000000e+00 : f32
    %4 = vector.broadcast %cst : f32 to vector<4x8xf32>
    %5 = arith.addf %4, %3 : vector<4x8xf32>
    %6 = arith.divf %4, %5 : vector<4x8xf32>
    %7 = arith.mulf %1, %6 : vector<4x8xf32>
    %c0_2 = arith.constant 0 : index
    %c0_3 = arith.constant 0 : index
    %8 = vector.load %arg3[%c0_2, %c0_3] : memref<8x4xf32, #tpu.memory_space<vmem>>, vector<8x4xf32>
    %cst_4 = arith.constant dense<0.000000e+00> : vector<8x8xf32>
    %9 = tpu.matmul %8, %7, %cst_4 {dimension_numbers = #tpu.dot_dimension_numbers<[1], [0], [0], [1], [0, 0, 1, 1], [], []>} : vector<8x4xf32>, vector<4x8xf32>, vector<8x8xf32> -> vector<8x8xf32>
    %c0_5 = arith.constant 0 : index
    %c0_6 = arith.constant 0 : index
    %10 = vector.load %arg4[%c0_5, %c0_6] : memref<8x1xf32, #tpu.memory_space<vmem>>, vector<8x1xf32>
    %11 = vector.broadcast %10 : vector<8x1xf32> to vector<8x8xf32>
    %12 = arith.addf %9, %11 : vector<8x8xf32>
    %c0_7 = arith.constant 0 : index
    %c0_8 = arith.constant 0 : index
    %c0_9 = arith.constant 0 : index
    %13 = vector.load %arg5[%c0_7, %c0_8, %c0_9] : memref<1x8x8xf32, #tpu.memory_space<vmem>>, vector<1x8x8xf32>
    %14 = vector.shape_cast %13 : vector<1x8x8xf32> to vector<8x8xf32>
    %15 = vector.shape_cast %12 : vector<8x8xf32> to vector<1x8x8xf32>
    tpu.vector_store %arg5[%c0_7, %c0_8, %c0_9], %15 {strides = array<i32>} : memref<1x8x8xf32, #tpu.memory_space<vmem>>, vector<1x8x8xf32>,
    return
  }
  func.func @transform_0(%arg0: i32, %arg1: i32) -> (i32, i32, i32) {
    %c0_i32 = arith.constant 0 : i32
    %c0_i32_0 = arith.constant 0 : i32
    return %arg0, %c0_i32, %arg1 : i32, i32, i32
  }
  func.func @transform_1(%arg0: i32, %arg1: i32) -> (i32, i32) {
    %c0_i32 = arith.constant 0 : i32
    %c0_i32_0 = arith.constant 0 : i32
    %c0_i32_1 = arith.constant 0 : i32
    return %c0_i32, %c0_i32_0 : i32, i32
  }
  func.func @transform_2(%arg0: i32, %arg1: i32) -> (i32, i32) {
    %c0_i32 = arith.constant 0 : i32
    %c0_i32_0 = arith.constant 0 : i32
    %c0_i32_1 = arith.constant 0 : i32
    return %c0_i32, %c0_i32_0 : i32, i32
  }
  func.func @transform_3(%arg0: i32, %arg1: i32) -> (i32, i32, i32) {
    %c0_i32 = arith.constant 0 : i32
    %c0_i32_0 = arith.constant 0 : i32
    return %arg0, %c0_i32, %arg1 : i32, i32, i32
  }
}

</mosaic_0001>

<llo_original>
// kernel: factorized_reduce.1
$region0: #{factorized_reduce.1}
  #allocation0 [shape = 'u32[]', space=smem, size = 0x4, offset = 0x4, fixed_abs, tag = 'smem constant byte address 0x4 - core index']
  #allocation1 [shape = 'u32[144,128]{1,0:T(1,128)}', space=vmem, size = 0x12000, scoped, tag = 'internal scratch']
  %s0 = inlined_call_operand.vmem [shape: f32[2,4,8], index: 0, kind: input, shape index: {}]
  %s1 = inlined_call_operand.vmem [shape: f32[8,4], index: 1, kind: input, shape index: {}]
  %s2 = inlined_call_operand.vmem [shape: f32[8,1], index: 2, kind: input, shape index: {}]
  %s3 = inlined_call_operand.hbm [shape: f32[2,8,8], index: 3, kind: output, shape index: {}]
  %s4 = sld [smem:[#allocation0]]
  $region45: #{factorized_reduce.1} parent=0
    _
  %s6 = ssub.s32 1, %s4
  %s7 = scalar_select 0, %s6, %s4
  $region1: #{factorized_reduce.1} parent=0
    #allocation2 [shape = 'u8[8192]{0}', space=vmem, size = 0x2000, scoped, tag = 'output window, operand 0']
    #allocation3 [shape = 's32[2]{0}', space=sflag, size = 0x8, scoped, tag = 'scoped memory for factorized_reduce.1']
    %8 = vsyncpa [#allocation3], 0
    %s9 = scalar_lea.sflag [#allocation3], 1
    %10 = vsyncpa %s9, 0
    loop: start=0, step=1, limit=4
    $region2: #{factorized_reduce.1} parent=1 // loop_pre_header
      _
    $region3: #{factorized_reduce.1} parent=1 // loop_header
      %s12 = sphi 0, %s16
      %p13 = scmp.ge.s32.totalorder %s12, 4
      %s19 = sphi 0, %s31
      %s20 = sphi 0, %s27
      %s21 = sphi 0, %s19
      %s22 = sphi 0, %s20
      %s23 = sphi 0, %s21
      %s24 = sphi 0, %s22
      %s36 = sphi 0, %s38
      %s39 = sphi 0, %s36
      %s40 = sphi 0, %s39
      %s56 = sphi 0, %s40
      %s60 = sphi 0, %s60
      %s62 = sphi 0, %s60
      %s63 = sphi 0, %s62
      %s77 = sphi 0, %s63
      %s81 = sphi 0, %s81
      %s83 = sphi 0, %s81
      %s84 = sphi 0, %s83
      %s98 = sphi 0, %s84
      %s106 = sphi 0, %s108
      %s109 = sphi 0, %s106
      %s110 = sphi 0, %s109
      %s126 = sphi 0, %s110
    $region4: #{factorized_reduce.1} parent=1 // loop_header_branch
      %15 = sbr.rel (%p13) target = $region8
    $region5: #{factorized_reduce.1} parent=1 // loop_body
      %s17 = ssub.s32 %s12, 1
      %s18 = ssub.s32 %s12, 2
      %s25 = sadd.s32 1, %s20
      %p26 = scmp.ge.s32.totalorder %s25, 1
      %s27 = scalar_select %p26, 0, %s25
      %s28 = sadd.s32 1, %s19
      %s29 = scalar_select %p26, %s28, %s19
      %p30 = scmp.ge.s32.totalorder %s29, 2
      %s31 = scalar_select %p30, 0, %s29
      %s32 = ssub.s32 %s19, %s31
      %s33 = ssub.s32 %s20, %s27
      %s34 = sor.u32 %s32, %s33
      %p35 = scmp.eq.s32.totalorder %s34, 0
      %s37 = sadd.s32 %s36, 1
      %s38 = scalar_select %p35, %s36, %s37
      %p41 = pneg %p35
      %p42 = scmp.eq.s32.totalorder %s12, 1
      %p43 = por %p41, %p42
      %p44 = scmp.ne.s32.totalorder %s36, %s39
      %p45 = scmp.eq.s32.totalorder %s12, 0
      %p46 = por %p44, %p45
      %p47 = scmp.ne.s32.totalorder %s36, %s39
      %p48 = scmp.eq.s32.totalorder %s17, 1
      %p49 = por %p47, %p48
      %p50 = scmp.ne.s32.totalorder %s39, %s40
      %p51 = scmp.eq.s32.totalorder %s17, 0
      %p52 = por %p50, %p51
      %p53 = scmp.ne.s32.totalorder %s39, %s40
      %p54 = scmp.eq.s32.totalorder %s18, 1
      %p55 = por %p53, %p54
      %p57 = scmp.ne.s32.totalorder %s40, %s56
      %p58 = scmp.eq.s32.totalorder %s18, 0
      %p59 = por %p57, %p58
      %s61 = sadd.s32 %s60, 1
      %p64 = scmp.eq.s32.totalorder %s12, 1
      %p65 = scmp.ne.s32.totalorder %s60, %s62
      %p66 = scmp.eq.s32.totalorder %s12, 0
      %p67 = por %p65, %p66
      %p68 = scmp.ne.s32.totalorder %s60, %s62
      %p69 = scmp.eq.s32.totalorder %s17, 1
      %p70 = por %p68, %p69
      %p71 = scmp.ne.s32.totalorder %s62, %s63
      %p72 = scmp.eq.s32.totalorder %s17, 0
      %p73 = por %p71, %p72
      %p74 = scmp.ne.s32.totalorder %s62, %s63
      %p75 = scmp.eq.s32.totalorder %s18, 1
      %p76 = por %p74, %p75
      %p78 = scmp.ne.s32.totalorder %s63, %s77
      %p79 = scmp.eq.s32.totalorder %s18, 0
      %p80 = por %p78, %p79
      %s82 = sadd.s32 %s81, 1
      %p85 = scmp.eq.s32.totalorder %s12, 1
      %p86 = scmp.ne.s32.totalorder %s81, %s83
      %p87 = scmp.eq.s32.totalorder %s12, 0
      %p88 = por %p86, %p87
      %p89 = scmp.ne.s32.totalorder %s81, %s83
      %p90 = scmp.eq.s32.totalorder %s17, 1
      %p91 = por %p89, %p90
      %p92 = scmp.ne.s32.totalorder %s83, %s84
      %p93 = scmp.eq.s32.totalorder %s17, 0
      %p94 = por %p92, %p93
      %p95 = scmp.ne.s32.totalorder %s83, %s84
      %p96 = scmp.eq.s32.totalorder %s18, 1
      %p97 = por %p95, %p96
      %p99 = scmp.ne.s32.totalorder %s84, %s98
      %p100 = scmp.eq.s32.totalorder %s18, 0
      %p101 = por %p99, %p100
      %s102 = ssub.s32 %s19, %s31
      %s103 = ssub.s32 %s20, %s27
      %s104 = sor.u32 %s102, %s103
      %p105 = scmp.eq.s32.totalorder %s104, 0
      %s107 = sadd.s32 %s106, 1
      %s108 = scalar_select %p105, %s106, %s107
      %p111 = pneg %p105
      %p112 = scmp.eq.s32.totalorder %s12, 1
      %p113 = por %p111, %p112
      %p114 = scmp.ne.s32.totalorder %s106, %s109
      %p115 = scmp.eq.s32.totalorder %s12, 0
      %p116 = por %p114, %p115
      %p117 = scmp.ne.s32.totalorder %s106, %s109
      %p118 = scmp.eq.s32.totalorder %s17, 1
      %p119 = por %p117, %p118
      %p120 = scmp.ne.s32.totalorder %s109, %s110
      %p121 = scmp.eq.s32.totalorder %s17, 0
      %p122 = por %p120, %p121
      %p123 = scmp.ne.s32.totalorder %s109, %s110
      %p124 = scmp.eq.s32.totalorder %s18, 1
      %p125 = por %p123, %p124
      %p127 = scmp.ne.s32.totalorder %s110, %s126
      %p128 = scmp.eq.s32.totalorder %s18, 0
      %p129 = por %p127, %p128
      %p130 = scmp.le.s32.totalorder 1, %s12
      %p131 = scmp.lt.s32.totalorder %s12, 3
      %p132 = pnand %p130, %p131
      %p133 = pneg %p132
      // Predicated region
      $region9: #{factorized_reduce.1} parent=5 // pred_check
        _
      $region10: #{factorized_reduce.1} parent=5 // pred_check_branch
        %135 = sbr.rel (%p132) target = $region12
      $region11: #{factorized_reduce.1} parent=5 // pred_region
        %s136 = ssub.s32 %s12, 1
        // Predicated region
        $region13: #{factorized_reduce.1} parent=11 // pred_check
          %p137 = pneg %p73
        $region14: #{factorized_reduce.1} parent=11 // pred_check_branch
          %139 = sbr.rel (%p137) target = $region16
        $region15: #{factorized_reduce.1} parent=11 // pred_region
          _
        $region16: #{factorized_reduce.1} parent=11 // pred_fallthru
          _
        // Predicated region
        $region17: #{factorized_reduce.1} parent=11 // pred_check
          %p140 = pneg %p94
        $region18: #{factorized_reduce.1} parent=11 // pred_check_branch
          %142 = sbr.rel (%p140) target = $region20
        $region19: #{factorized_reduce.1} parent=11 // pred_region
          _
        $region20: #{factorized_reduce.1} parent=11 // pred_fallthru
          _
      $region12: #{factorized_reduce.1} parent=5 // pred_fallthru
        _
      %p143 = scmp.lt.s32.totalorder %s12, 2
      // Predicated region
      $region21: #{factorized_reduce.1} parent=5 // pred_check
        %p144 = pneg %p143
      $region22: #{factorized_reduce.1} parent=5 // pred_check_branch
        %146 = sbr.rel (%p144) target = $region24
      $region23: #{factorized_reduce.1} parent=5 // pred_region
        // Predicated region
        $region25: #{factorized_reduce.1} parent=23 // pred_check
          %p147 = pneg %p46
        $region26: #{factorized_reduce.1} parent=23 // pred_check_branch
          %149 = sbr.rel (%p147) target = $region28
        $region27: #{factorized_reduce.1} parent=23 // pred_region
          %p150 = scmp.lt.s32.totalorder %s19, 1
          %s151 = scalar_select %p150, %s19, 1
          %p152 = scmp.lt.s32.totalorder %s20, 0
          %s153 = scalar_select %p152, %s20, 0
          %s154 = sadd.s32 %s153, %s151
          %s155 = smul.addr %s154, 4
          %s156 = scalar_lea.vmem %s0, %s155
        $region28: #{factorized_reduce.1} parent=23 // pred_fallthru
          _
      $region24: #{factorized_reduce.1} parent=5 // pred_fallthru
        _
      %p157 = scmp.le.s32.totalorder 1, %s12
      %p158 = scmp.lt.s32.totalorder %s12, 3
      %p159 = pnand %p157, %p158
      %p160 = pneg %p159
      // Predicated region
      $region29: #{factorized_reduce.1} parent=5 // pred_check
        _
      $region30: #{factorized_reduce.1} parent=5 // pred_check_branch
        %162 = sbr.rel (%p159) target = $region32
      $region31: #{factorized_reduce.1} parent=5 // pred_region
        %s163 = ssub.s32 %s12, 1
        %p164 = scmp.lt.s32.totalorder %s21, 1
        %s165 = scalar_select %p164, %s21, 1
        %p166 = scmp.lt.s32.totalorder %s22, 0
        %s167 = scalar_select %p166, %s22, 0
        %s168 = sadd.s32 %s167, %s165
        %s169 = smul.addr %s168, 4
        %s170 = scalar_lea.vmem %s0, %s169
        %p171 = pneg %p52
        %p172 = pneg %p49
        %p173 = pneg %p73
        %p174 = pneg %p70
        %p175 = pneg %p94
        %p176 = pneg %p91
        %p177 = pneg %p122
        %p178 = pneg %p119
        %s179 = sand.u32 %s109, 1
        %s180 = scalar_lea.sflag [#allocation3], %s179
        %s181 = sand.u32 %s109, 1
        %s182 = smul.addr %s181, 8
        %s183 = scalar_lea.vmem [#allocation2], %s182
        %p184 = scmp.lt.s32.totalorder %s21, 1
        %s185 = scalar_select %p184, %s21, 1
        %p186 = scmp.lt.s32.totalorder %s22, 0
        %s187 = scalar_select %p186, %s22, 0
        %s188 = sadd.s32 %s187, %s185
        %s189 = smul.addr %s188, 4
        %s190 = scalar_lea.vmem %s0, %s189
        %v191 = vld [vmem:[%s190] sm:$0xf]
        %v192 = vxor.u32 %v191, 2147483648
        %v193 = vmul.f32 %v192, 1.442695
        %v194 = vpow.pop %v193
        %v195 = vadd.f32 %v194, 1.0
        %v196 = vrcp.pop %v195
        %v197 = vmul.f32 1.0, %v196
        %v198 = vmul.f32 %v191, %v197
        %v199 = vld [vmem:[%s1] sm:$0xff]
        %v200 = vld [vmem:[%s2] sm:$0xff]
        %202 = vset.pattern.permute.xlu0 0
        %203 = vperm.xlu0 %202, %v200
        %v204 = vpop.permute.xlu0 %203
        %vm206 = vcmask 31744
        %v208 = vsel %vm206, %v199, 0
        %vm210 = vcmask 1043456
        %v212 = vsel %vm210, %v198, 0
        %214 = vmatprep.subr.mxu0 0.0
        %215 = vmatpush1.msra.mxu0 %v212
        %216 = vmatprep.subr.mxu0 0.0
        %217 = vmatpush1.msra.mxu0 0.0
        %218 = vmatprep.subr.mxu0 0.0
        %219 = vmatpush1.msra.mxu0 0.0
        %220 = vmatprep.subr.mxu0 0.0
        %221 = vmatpush1.msra.mxu0 0.0
        %222 = vmatprep.subr.mxu0 0.0
        %223 = vmatpush1.msra.mxu0 0.0
        %224 = vmatprep.subr.mxu0 0.0
        %225 = vmatpush1.msra.mxu0 0.0
        %226 = vmatprep.subr.mxu0 0.0
        %227 = vmatpush1.msra.mxu0 0.0
        %228 = vmatprep.subr.mxu0 0.0
        %229 = vmatpush1.msra.mxu0 0.0
        %230 = vmatprep.subr.mxu0 0.0
        %231 = vmatpush1.msra.mxu0 0.0
        %232 = vmatprep.subr.mxu0 0.0
        %233 = vmatpush1.msra.mxu0 0.0
        %234 = vmatprep.subr.mxu0 0.0
        %235 = vmatpush1.msra.mxu0 0.0
        %236 = vmatprep.subr.mxu0 0.0
        %237 = vmatpush1.msra.mxu0 0.0
        %238 = vmatprep.subr.mxu0 0.0
        %239 = vmatpush1.msra.mxu0 0.0
        %240 = vmatprep.subr.mxu0 0.0
        %241 = vmatpush1.msra.mxu0 0.0
        %242 = vmatprep.subr.mxu0 0.0
        %243 = vmatpush1.msra.mxu0 0.0
        %244 = vmatprep.subr.mxu0 0.0
        %245 = vmatpush1.msra.mxu0 0.0
        %246 = vmatprep.subr.mxu0 0.0
        %247 = vmatpush1.msra.mxu0 0.0
        %248 = vmatprep.subr.mxu0 0.0
        %249 = vmatpush1.msra.mxu0 0.0
        %250 = vmatprep.subr.mxu0 0.0
        %251 = vmatpush1.msra.mxu0 0.0
        %252 = vmatprep.subr.mxu0 0.0
        %253 = vmatpush1.msra.mxu0 0.0
        %254 = vmatprep.subr.mxu0 0.0
        %255 = vmatpush1.msra.mxu0 0.0
        %256 = vmatprep.subr.mxu0 0.0
        %257 = vmatpush1.msra.mxu0 0.0
        %258 = vmatprep.subr.mxu0 0.0
        %259 = vmatpush1.msra.mxu0 0.0
        %260 = vmatprep.subr.mxu0 0.0
        %261 = vmatpush1.msra.mxu0 0.0
        %262 = vmatprep.subr.mxu0 0.0
        %263 = vmatpush1.msra.mxu0 0.0
        %264 = vmatprep.subr.mxu0 0.0
        %265 = vmatpush1.msra.mxu0 0.0
        %266 = vmatprep.subr.mxu0 0.0
        %267 = vmatpush1.msra.mxu0 0.0
        %268 = vmatprep.subr.mxu0 0.0
        %269 = vmatpush1.msra.mxu0 0.0
        %270 = vmatprep.subr.mxu0 0.0
        %271 = vmatpush1.msra.mxu0 0.0
        %272 = vmatprep.subr.mxu0 0.0
        %273 = vmatpush1.msra.mxu0 0.0
        %274 = vmatprep.subr.mxu0 0.0
        %275 = vmatpush1.msra.mxu0 0.0
        %276 = vmatprep.subr.mxu0 0.0
        %277 = vmatpush1.msra.mxu0 0.0
        %278 = vmatprep.mubr.f32.mxu0 0.0
        %279 = vmatmul.mubr.f32.gmra.mrb[0].mxu0 %v208
        %v280 = vpop.f32.mrb[0].mxu0
        %v281 = vadd.f32 %v204, %v280
        %v282 = vpop.f32.mrb[0].mxu0
        %283 = vdwg.mxu0
        %vm284 = vcmask 64512
        %285 = vst.msk [vmem:[%s183] sm:$0xff] %vm284, %v281
        %s286 = sand.u32 %s109, 1
        %s287 = scalar_lea.sflag [#allocation3], %s286
        %s288 = sand.u32 %s109, 1
        %s289 = smul.addr %s288, 8
        %s290 = scalar_lea.vmem [#allocation2], %s289
        // Predicated region
        $region33: #{factorized_reduce.1} parent=31 // pred_check
          %p291 = pneg %p119
        $region34: #{factorized_reduce.1} parent=31 // pred_check_branch
          %293 = sbr.rel (%p291) target = $region36
        $region35: #{factorized_reduce.1} parent=31 // pred_region
          %s295 = ssub.s32 128, 128
          %296 = vsyncadd %s287, %s295
          %s297 = sadd.s32 %s22, %s21
          %s298 = smul.addr %s297, 128
          %s299 = scalar_lea.hbm %s3, %s298
          %s301 = sshll.u32 %s290, 4
          %s302 = int_to_ptr.vmem [resolvable:$true] %s301
          %304 = dma.vmem_to_hbm [thread:$0]  %s302, 128, %s299, %s287
        $region36: #{factorized_reduce.1} parent=31 // pred_fallthru
          _
      $region32: #{factorized_reduce.1} parent=5 // pred_fallthru
        _
      %p305 = scmp.le.s32.totalorder 2, %s12
      // Predicated region
      $region37: #{factorized_reduce.1} parent=5 // pred_check
        %p306 = pneg %p305
      $region38: #{factorized_reduce.1} parent=5 // pred_check_branch
        %308 = sbr.rel (%p306) target = $region40
      $region39: #{factorized_reduce.1} parent=5 // pred_region
        %s309 = ssub.s32 %s12, 2
        // Predicated region
        $region41: #{factorized_reduce.1} parent=39 // pred_check
          %p310 = pneg %p125
        $region42: #{factorized_reduce.1} parent=39 // pred_check_branch
          %312 = sbr.rel (%p310) target = $region44
        $region43: #{factorized_reduce.1} parent=39 // pred_region
          %s313 = sand.u32 %s110, 1
          %s314 = scalar_lea.sflag [#allocation3], %s313
          %s315 = sand.u32 %s110, 1
          %s316 = smul.addr %s315, 8
          %s317 = scalar_lea.vmem [#allocation2], %s316
          %318 = dma.done %s314, 128
        $region44: #{factorized_reduce.1} parent=39 // pred_fallthru
          _
      $region40: #{factorized_reduce.1} parent=5 // pred_fallthru
        _
    $region6: #{factorized_reduce.1} parent=1 // loop_footer
      %s16 = sadd.s32 1, %s12
    $region7: #{factorized_reduce.1} parent=1 // loop_footer_branch
      %11 = sbr.rel target = $region3
    $region8: #{factorized_reduce.1} parent=1 // loop_exit
      _
    %319 = vsyncpa [#allocation3], 1
    %s320 = scalar_lea.sflag [#allocation3], 1
    %321 = vsyncpa %s320, 1

</llo_original>
